<compile_context>
chip_gen: v7x
topology: tpu7x:2x2x1
jax: 0.10.0
libtpu: 0.0.40
codegen_flags: <defaults>
</compile_context>

<pallas_src>
import functools

import jax
import jax.numpy as jnp
from jax.experimental import pallas as pl
from jax.experimental.pallas import tpu as pltpu


# ----------------------------- helpers ------------------------------------


def _round_up(x, m):
    return ((x + m - 1) // m) * m


def _padded_block_bytes(shape, dtype):
    """VMEM bytes of a block, accounting for (sublane, lane) padding."""
    dtype = jnp.dtype(dtype)
    itemsize = dtype.itemsize
    sub = 8 * max(1, 4 // itemsize)  # 8 for f32, 16 for bf16
    dims = list(shape)
    if len(dims) >= 1:
        dims[-1] = _round_up(dims[-1], 128)
    if len(dims) >= 2:
        dims[-2] = _round_up(dims[-2], sub)
    n = 1
    for d in dims:
        n *= d
    return n * itemsize


def _choose_block_b(B, T_pad, H, itemsize, target_tile_bytes):
    """Byte-based tile sizing: aim for ~target_tile_bytes of (lane-padded)
    x data per grid step, keep block_b sublane-aligned, and never collapse a
    large batch to a single grid step (v7x has 2 TensorCores)."""
    lane_h = _round_up(H, 128)
    bytes_per_row = T_pad * lane_h * itemsize  # one batch row's x tile in VMEM
    bb = max(1, target_tile_bytes // bytes_per_row)
    if bb >= B:
        if B >= 16:
            # Whole batch fits; still split across >=2 grid steps for megacore.
            half = _round_up(pl.cdiv(B, 2), 8)
            return min(half, B)
        return B
    bb = max(8, (bb // 8) * 8)
    return min(bb, B)


# ------------------------------ kernel ------------------------------------


def make_attention_kernel(t_valid):
    def attention_kernel(x_ref, w_ref, b_ref, c_ref, out_ref, alpha_ref):
        # x_ref:     (Bb, T_pad, H)  chunk of batch sequences (compute dtype)
        # w_ref:     (H, H)          pre-transposed Linear weight (u = x @ w + b)
        # b_ref:     (1, H)          bias (f32)
        # c_ref:     (H, 1)          context vector column (f32, MXU matvec)
        # out_ref:   (Bb, H)         attended output (lane-dense)
        # alpha_ref: (Bb, T_pad)     attention weights (lane-dense)
        Bb, T, H = x_ref.shape

        x3 = x_ref[...]                                   # (Bb, T, H)
        # T is padded to a sublane multiple in the wrapper, so this fold is a
        # free layout no-op (no relayout copy).
        x2 = x3.reshape(Bb * T, H)

        # u = tanh(x @ W.T + b): one big MXU pass (f32 accumulation), tanh on EUP.
        u = jnp.tanh(
            jnp.dot(x2, w_ref[...], preferred_element_type=jnp.float32)
            + b_ref[...]
        )                                                 # (Bb*T, H) f32

        # scores = u . context_vector as an MXU matvec.
        s = jnp.dot(u, c_ref[...], preferred_element_type=jnp.float32)  # (Bb*T, 1)
        s3 = s.reshape(Bb, T, 1)                          # per-sequence scores

        if t_valid < T:
            # Mask padded sequence positions before the softmax.
            t_idx = jax.lax.broadcasted_iota(jnp.int32, (Bb, T, 1), 1)
            s3 = jnp.where(t_idx < t_valid, s3, jnp.finfo(jnp.float32).min)

        # Softmax over the sequence axis (PyTorch dim=1), numerically stable,
        # exact reciprocal (only Bb scalars -> approx buys nothing).
        m = jnp.max(s3, axis=1, keepdims=True)            # (Bb, 1, 1)
        e = jnp.exp(s3 - m)                               # (Bb, T, 1)
        denom = jnp.sum(e, axis=1, keepdims=True)         # (Bb, 1, 1)
        alpha3 = e / denom                                 # (Bb, T, 1)

        # attended[b] = sum_t alpha[b, t] * x[b, t, :]  (f32 accumulation)
        attended = jnp.sum(x3.astype(jnp.float32) * alpha3, axis=1)   # (Bb, H)

        out_ref[...] = attended.astype(out_ref.dtype)     # dense (Bb, H) store
        alpha_ref[...] = alpha3.reshape(Bb, T).astype(alpha_ref.dtype)

    return attention_kernel


# ------------------------------ wrapper -----------------------------------


def attention_layer(x, w, b, context_vector, *, block_b=None,
                    compute_dtype=jnp.bfloat16, target_tile_bytes=2 << 20):
    """x: (B, T, H); w: (H, H) Linear weight (PyTorch layout, out x in);
    b: (H,); context_vector: (H,). Returns (attended (B, H), alpha (B, T))."""
    B, T, H = x.shape
    out_dtype = x.dtype
    compute_dtype = jnp.dtype(compute_dtype)
    itemsize = compute_dtype.itemsize

    # Pad T to a sublane multiple (8 for 4-byte, 16 for 2-byte) so the
    # in-kernel (Bb,T,H)->(Bb*T,H) fold is layout-free.
    sublane = 8 * max(1, 4 // itemsize)
    T_pad = _round_up(T, sublane)

    # Narrow HBM-resident x / W to the compute dtype (bf16 halves x traffic);
    # bias / context vector stay f32 (tiny, keeps accumulation exact-ish).
    xc = x.astype(compute_dtype)
    if T_pad != T:
        # TODO(synk): for production, require T pre-aligned to avoid this extra
        # HBM pad copy of x.
        xc = jnp.pad(xc, ((0, 0), (0, T_pad - T), (0, 0)))
    w_t = jnp.transpose(w).astype(compute_dtype)    # so that u = x @ w_t + b
    b2 = b.reshape(1, H).astype(jnp.float32)
    c_col = context_vector.reshape(H, 1).astype(jnp.float32)

    if block_b is None:
        block_b = _choose_block_b(B, T_pad, H, itemsize, target_tile_bytes)
    block_b = max(1, min(block_b, B))
    grid_b = pl.cdiv(B, block_b)

    out_shapes = (
        jax.ShapeDtypeStruct((B, H), out_dtype),       # attended
        jax.ShapeDtypeStruct((B, T_pad), out_dtype),   # alpha (padded T)
    )

    grid_spec = pltpu.PrefetchScalarGridSpec(
        num_scalar_prefetch=0,
        grid=(grid_b,),
        in_specs=[
            pl.BlockSpec((block_b, T_pad, H), lambda i: (i, 0, 0)),   # x chunk
            pl.BlockSpec((H, H), lambda i: (0, 0)),                   # weight
            pl.BlockSpec((1, H), lambda i: (0, 0)),                   # bias
            pl.BlockSpec((H, 1), lambda i: (0, 0)),                   # context
        ],
        out_specs=[
            pl.BlockSpec((block_b, H), lambda i: (i, 0)),             # attended
            pl.BlockSpec((block_b, T_pad), lambda i: (i, 0)),         # alpha
        ],
    )

    # VMEM budget: double-buffered x block + both output blocks (+ resident
    # params, conservatively also counted twice), with margin; keep below the
    # 64 MiB physical VMEM of a v7x TensorCore.
    per_step_bytes = (
        _padded_block_bytes((block_b, T_pad, H), compute_dtype)
        + _padded_block_bytes((block_b, H), out_dtype)
        + _padded_block_bytes((block_b, T_pad), out_dtype)
        + _padded_block_bytes((H, H), compute_dtype)
        + _padded_block_bytes((1, H), jnp.float32)
        + _padded_block_bytes((H, 1), jnp.float32)
    )
    vmem_limit = int(min(max(2 * per_step_bytes * 2, 8 << 20), 48 << 20))

    cost = pl.CostEstimate(
        flops=2 * B * T * H * H + 4 * B * T * H,        # matmul + matvec + wsum
        transcendentals=B * T * (H + 1),                # tanh + exp
        bytes_accessed=(xc.size * itemsize + w_t.size * itemsize
                        + (b2.size + c_col.size) * 4
                        + (B * H + B * T_pad) * jnp.dtype(out_dtype).itemsize),
    )

    attended, alpha = pl.pallas_call(
        make_attention_kernel(T),
        out_shape=out_shapes,
        grid_spec=grid_spec,
        compiler_params=pltpu.CompilerParams(
            dimension_semantics=("parallel",),
            vmem_limit_bytes=vmem_limit,
        ),
        cost_estimate=cost,
    )(xc, w_t, b2, c_col)

    return attended, alpha[:, :T]


# ------------------------------ reference ---------------------------------


def attention_layer_ref(x, w, b, context_vector):
    u = jnp.tanh(jnp.einsum("bth,oh->bto", x, w) + b)
    scores = jnp.einsum("bth,h->bt", u, context_vector)
    alpha = jax.nn.softmax(scores, axis=1)
    attended = jnp.sum(x * alpha[..., None], axis=1)
    return attended, alpha


if __name__ == "__main__":
    B, T, H = 2, 8, 32
    key = jax.random.PRNGKey(0)
    kx, kw, kb, kc = jax.random.split(key, 4)

    x = jax.random.normal(kx, (B, T, H), dtype=jnp.float32)
    # Deterministic "parameters" (Linear weight/bias + context vector).
    w = jax.random.normal(kw, (H, H), dtype=jnp.float32) * 0.1
    b = jax.random.normal(kb, (H,), dtype=jnp.float32) * 0.1
    context_vector = jax.random.normal(kc, (H,), dtype=jnp.float32)

    ref_attended, ref_alpha = attention_layer_ref(x, w, b, context_vector)

    # Default path: bf16 HBM data, f32 accumulation (exercises T padding/mask).
    attended, alpha = attention_layer(x, w, b, context_vector)
    attended = jax.block_until_ready(attended)
    alpha = jax.block_until_ready(alpha)
    assert attended.shape == (B, H) and alpha.shape == (B, T)
    assert jnp.allclose(attended, ref_attended, atol=2e-2, rtol=2e-2)
    assert jnp.allclose(alpha, ref_alpha, atol=2e-2, rtol=2e-2)
    assert jnp.allclose(jnp.sum(alpha, axis=1), jnp.ones((B,)), atol=1e-5)

    # Full-precision path: exact softmax, tight tolerances.
    attended32, alpha32 = attention_layer(
        x, w, b, context_vector, compute_dtype=jnp.float32)
    attended32 = jax.block_until_ready(attended32)
    alpha32 = jax.block_until_ready(alpha32)
    assert jnp.allclose(attended32, ref_attended, atol=1e-5, rtol=1e-5)
    assert jnp.allclose(alpha32, ref_alpha, atol=1e-5, rtol=1e-5)
    assert jnp.allclose(jnp.sum(alpha32, axis=1), jnp.ones((B,)), atol=1e-6)

    print("KERNEL_OK")
</pallas_src>

<mosaic_0001>
module attributes {stable_mosaic.version = 11 : i64} {
  func.func @attention_kernel(%arg0: i32, %arg1: memref<2x16x32xbf16, #tpu.memory_space<vmem>>, %arg2: memref<32x32xbf16, #tpu.memory_space<vmem>>, %arg3: memref<1x32xf32, #tpu.memory_space<vmem>>, %arg4: memref<32x1xf32, #tpu.memory_space<vmem>>, %arg5: memref<2x32xf32, #tpu.memory_space<vmem>>, %arg6: memref<2x16xf32, #tpu.memory_space<vmem>>) attributes {dimension_semantics = [#tpu.dimension_semantics<parallel>], iteration_bounds = array<i64: 1>, scalar_prefetch = 0 : i64, scratch_operands = 0 : i64, tpu.core_type = #tpu.core_type<tc>, window_params = [{transform_indices = @transform_0, window_bounds = array<i64: 2, 16, 32>}, {pipeline_mode = #tpu.pipeline_mode<synchronous>, transform_indices = @transform_1, window_bounds = array<i64: 32, 32>}, {pipeline_mode = #tpu.pipeline_mode<synchronous>, transform_indices = @transform_2, window_bounds = array<i64: 1, 32>}, {pipeline_mode = #tpu.pipeline_mode<synchronous>, transform_indices = @transform_3, window_bounds = array<i64: 32, 1>}, {transform_indices = @transform_4, window_bounds = array<i64: 2, 32>}, {transform_indices = @transform_5, window_bounds = array<i64: 2, 16>}]} {
    %c0 = arith.constant 0 : index
    %c0_0 = arith.constant 0 : index
    %c0_1 = arith.constant 0 : index
    %0 = vector.load %arg1[%c0, %c0_0, %c0_1] : memref<2x16x32xbf16, #tpu.memory_space<vmem>>, vector<2x16x32xbf16>
    %1 = vector.shape_cast %0 : vector<2x16x32xbf16> to vector<32x32xbf16>
    %c0_2 = arith.constant 0 : index
    %c0_3 = arith.constant 0 : index
    %2 = vector.load %arg2[%c0_2, %c0_3] : memref<32x32xbf16, #tpu.memory_space<vmem>>, vector<32x32xbf16>
    %cst = arith.constant dense<0.000000e+00> : vector<32x32xf32>
    %3 = tpu.matmul %1, %2, %cst {dimension_numbers = #tpu.dot_dimension_numbers<[1], [0], [0], [1], [0, 0, 1, 1], [], []>} : vector<32x32xbf16>, vector<32x32xbf16>, vector<32x32xf32> -> vector<32x32xf32>
    %c0_4 = arith.constant 0 : index
    %c0_5 = arith.constant 0 : index
    %4 = vector.load %arg3[%c0_4, %c0_5] : memref<1x32xf32, #tpu.memory_space<vmem>>, vector<1x32xf32>
    %5 = vector.broadcast %4 : vector<1x32xf32> to vector<32x32xf32>
    %6 = arith.addf %3, %5 : vector<32x32xf32>
    %7 = math.tanh %6 : vector<32x32xf32>
    %c0_6 = arith.constant 0 : index
    %c0_7 = arith.constant 0 : index
    %8 = vector.load %arg4[%c0_6, %c0_7] : memref<32x1xf32, #tpu.memory_space<vmem>>, vector<32x1xf32>
    %cst_8 = arith.constant dense<0.000000e+00> : vector<32x1xf32>
    %9 = tpu.matmul %7, %8, %cst_8 {dimension_numbers = #tpu.dot_dimension_numbers<[1], [0], [0], [1], [0, 0, 1, 1], [], []>} : vector<32x32xf32>, vector<32x1xf32>, vector<32x1xf32> -> vector<32x1xf32>
    %10 = vector.shape_cast %9 : vector<32x1xf32> to vector<2x16x1xf32>
    %11 = tpu.iota {dimensions = array<i32: 1>} : vector<2x16x1xi32>
    %c8_i32 = arith.constant 8 : i32
    %12 = vector.broadcast %c8_i32 : i32 to vector<2x16x1xi32>
    %13 = arith.cmpi slt, %11, %12 : vector<2x16x1xi32>
    %cst_9 = arith.constant -3.40282347E+38 : f32
    %14 = vector.broadcast %cst_9 : f32 to vector<2x16x1xf32>
    %15 = arith.select %13, %10, %14 : vector<2x16x1xi1>, vector<2x16x1xf32>
    %cst_10 = arith.constant dense<0xFF800000> : vector<2x1xf32>
    %16 = vector.multi_reduction <maximumf>, %15, %cst_10 [1] : vector<2x16x1xf32> to vector<2x1xf32>
    %17 = vector.shape_cast %16 : vector<2x1xf32> to vector<2x1x1xf32>
    %18 = vector.broadcast %17 : vector<2x1x1xf32> to vector<2x16x1xf32>
    %19 = arith.subf %15, %18 : vector<2x16x1xf32>
    %20 = math.exp %19 : vector<2x16x1xf32>
    %cst_11 = arith.constant dense<0.000000e+00> : vector<2x1xf32>
    %21 = vector.multi_reduction <add>, %20, %cst_11 [1] : vector<2x16x1xf32> to vector<2x1xf32>
    %22 = vector.shape_cast %21 : vector<2x1xf32> to vector<2x1x1xf32>
    %23 = vector.broadcast %22 : vector<2x1x1xf32> to vector<2x16x1xf32>
    %24 = arith.divf %20, %23 : vector<2x16x1xf32>
    %25 = arith.extf %0 : vector<2x16x32xbf16> to vector<2x16x32xf32>
    %26 = vector.broadcast %24 : vector<2x16x1xf32> to vector<2x16x32xf32>
    %27 = arith.mulf %25, %26 : vector<2x16x32xf32>
    %cst_12 = arith.constant dense<0.000000e+00> : vector<2x32xf32>
    %28 = vector.multi_reduction <add>, %27, %cst_12 [1] : vector<2x16x32xf32> to vector<2x32xf32>
    %c0_13 = arith.constant 0 : index
    %c0_14 = arith.constant 0 : index
    %29 = vector.load %arg5[%c0_13, %c0_14] : memref<2x32xf32, #tpu.memory_space<vmem>>, vector<2x32xf32>
    tpu.vector_store %arg5[%c0_13, %c0_14], %28 {strides = array<i32>} : memref<2x32xf32, #tpu.memory_space<vmem>>, vector<2x32xf32>,
    %30 = vector.shape_cast %24 : vector<2x16x1xf32> to vector<2x16xf32>
    %c0_15 = arith.constant 0 : index
    %c0_16 = arith.constant 0 : index
    %31 = vector.load %arg6[%c0_15, %c0_16] : memref<2x16xf32, #tpu.memory_space<vmem>>, vector<2x16xf32>
    tpu.vector_store %arg6[%c0_15, %c0_16], %30 {strides = array<i32>} : memref<2x16xf32, #tpu.memory_space<vmem>>, vector<2x16xf32>,
    return
  }
  func.func @transform_0(%arg0: i32) -> (i32, i32, i32) {
    %c0_i32 = arith.constant 0 : i32
    %c0_i32_0 = arith.constant 0 : i32
    %c0_i32_1 = arith.constant 0 : i32
    return %arg0, %c0_i32, %c0_i32_0 : i32, i32, i32
  }
  func.func @transform_1(%arg0: i32) -> (i32, i32) {
    %c0_i32 = arith.constant 0 : i32
    %c0_i32_0 = arith.constant 0 : i32
    %c0_i32_1 = arith.constant 0 : i32
    return %c0_i32, %c0_i32_0 : i32, i32
  }
  func.func @transform_2(%arg0: i32) -> (i32, i32) {
    %c0_i32 = arith.constant 0 : i32
    %c0_i32_0 = arith.constant 0 : i32
    %c0_i32_1 = arith.constant 0 : i32
    return %c0_i32, %c0_i32_0 : i32, i32
  }
  func.func @transform_3(%arg0: i32) -> (i32, i32) {
    %c0_i32 = arith.constant 0 : i32
    %c0_i32_0 = arith.constant 0 : i32
    %c0_i32_1 = arith.constant 0 : i32
    return %c0_i32, %c0_i32_0 : i32, i32
  }
  func.func @transform_4(%arg0: i32) -> (i32, i32) {
    %c0_i32 = arith.constant 0 : i32
    %c0_i32_0 = arith.constant 0 : i32
    return %arg0, %c0_i32 : i32, i32
  }
  func.func @transform_5(%arg0: i32) -> (i32, i32) {
    %c0_i32 = arith.constant 0 : i32
    %c0_i32_0 = arith.constant 0 : i32
    return %arg0, %c0_i32 : i32, i32
  }
}

</mosaic_0001>

<llo_original>
// kernel: tpu_custom_call.1
$region0: #{tpu_custom_call.1}
  #allocation0 [shape = 'u32[]', space=smem, size = 0x4, offset = 0x4, fixed_abs, tag = 'smem constant byte address 0x4 - core index']
  #allocation1 [shape = 'u32[144,128]{1,0:T(1,128)}', space=vmem, size = 0x12000, scoped, tag = 'internal scratch']
  %s0 = inlined_call_operand.vmem [shape: bf16[2,16,32], index: 0, kind: input, shape index: {}]
  %s1 = inlined_call_operand.vmem [shape: bf16[32,32], index: 1, kind: input, shape index: {}]
  %s2 = inlined_call_operand.vmem [shape: f32[1,32], index: 2, kind: input, shape index: {}]
  %s3 = inlined_call_operand.vmem [shape: f32[32,1], index: 3, kind: input, shape index: {}]
  %s4 = inlined_call_operand.hbm [shape: f32[2,32], index: 4, kind: output, shape index: {0}]
  %s5 = inlined_call_operand.hbm [shape: f32[2,16], index: 5, kind: output, shape index: {1}]
  %6 = xla_tuple %s4, %s5
  %s7 = sld [smem:[#allocation0]]
  $region34: #{tpu_custom_call.1} parent=0
    _
  %s9 = ssub.s32 1, %s7
  %s10 = scalar_select 0, %s9, %s7
  $region1: #{tpu_custom_call.1} parent=0
    #allocation2 [shape = 'u8[1024]{0}', space=vmem, size = 0x400, scoped, tag = 'output window, operand 0, single buffered']
    #allocation3 [shape = 's32[1]{0}', space=sflag, size = 0x4, scoped, tag = 'scoped memory for tpu_custom_call.1']
    #allocation4 [shape = 'u8[1024]{0}', space=vmem, size = 0x400, scoped, tag = 'output window, operand 1, single buffered']
    #allocation5 [shape = 's32[1]{0}', space=sflag, size = 0x4, scoped, tag = 'scoped memory for tpu_custom_call.1']
    %11 = vsyncpa [#allocation3], 0
    %12 = vsyncpa [#allocation5], 0
    // Predicated region
    $region2: #{tpu_custom_call.1} parent=1 // pred_check
      _
    $region3: #{tpu_custom_call.1} parent=1 // pred_check_branch
      %14 = sbr.rel (0) target = $region5
    $region4: #{tpu_custom_call.1} parent=1 // pred_region
      _
    $region5: #{tpu_custom_call.1} parent=1 // pred_fallthru
      _
    // Predicated region
    $region6: #{tpu_custom_call.1} parent=1 // pred_check
      _
    $region7: #{tpu_custom_call.1} parent=1 // pred_check_branch
      %16 = sbr.rel (0) target = $region9
    $region8: #{tpu_custom_call.1} parent=1 // pred_region
      _
    $region9: #{tpu_custom_call.1} parent=1 // pred_fallthru
      _
    // Predicated region
    $region10: #{tpu_custom_call.1} parent=1 // pred_check
      _
    $region11: #{tpu_custom_call.1} parent=1 // pred_check_branch
      %18 = sbr.rel (0) target = $region13
    $region12: #{tpu_custom_call.1} parent=1 // pred_region
      _
    $region13: #{tpu_custom_call.1} parent=1 // pred_fallthru
      _
    // Predicated region
    $region14: #{tpu_custom_call.1} parent=1 // pred_check
      _
    $region15: #{tpu_custom_call.1} parent=1 // pred_check_branch
      %20 = sbr.rel (0) target = $region17
    $region16: #{tpu_custom_call.1} parent=1 // pred_region
      _
    $region17: #{tpu_custom_call.1} parent=1 // pred_fallthru
      _
    %v22 = vld [vmem:[%s0] sm:$0xf]
    %v23 = vld [vmem:[%s0 + $0x4] sm:$0xf]
    %v24 = vld [vmem:[%s0 + $0x8] sm:$0xf]
    %v25 = vld [vmem:[%s0 + $0xc] sm:$0xf]
    %v26 = vld [vmem:[%s1] sm:$0xf]
    %v27 = vld [vmem:[%s1 + $0x4] sm:$0xf]
    %v28 = vld [vmem:[%s1 + $0x8] sm:$0xf]
    %v29 = vld [vmem:[%s1 + $0xc] sm:$0xf]
    %v30 = vld [vmem:[%s2] sm:$0x1]
    %v32 = vlaneseq
    %v33 = vshrl.u32 %v32, 7
    %v34 = vsub.s32 0, %v33
    %v35 = vrot.slane %v30, %v34
    %v41 = vunpack.c.l.b16 %v22
    %v42 = vunpack.c.l.b16 %v23
    %v43 = vunpack.c.l.b16 %v24
    %v44 = vunpack.c.l.b16 %v25
    %v45 = vpack.c.b16 %v42, %v41
    %v46 = vpack.c.b16 %v44, %v43
    %v51 = vunpack.c.l.b16 %v26
    %v52 = vunpack.c.l.b16 %v27
    %v53 = vunpack.c.l.b16 %v28
    %v54 = vunpack.c.l.b16 %v29
    %v55 = vpack.c.b16 %v52, %v51
    %v56 = vpack.c.b16 %v54, %v53
    %vm59 = vcmask 261120
    %v61 = vsel %vm59, %v45, 0
    %v64 = vsel %vm59, %v46, 0
    %66 = vmatprep.subr.bf16.mxu0 0
    %67 = vmatpush1.bf16.msra.mxu0 %v55
    %68 = vmatprep.subr.bf16.mxu0 0
    %69 = vmatpush1.bf16.msra.mxu0 %v56
    %70 = vmatprep.subr.bf16.mxu0 0
    %71 = vmatpush1.bf16.msra.mxu0 0
    %72 = vmatprep.subr.bf16.mxu0 0
    %73 = vmatpush1.bf16.msra.mxu0 0
    %74 = vmatprep.subr.bf16.mxu0 0
    %75 = vmatpush1.bf16.msra.mxu0 0
    %76 = vmatprep.subr.bf16.mxu0 0
    %77 = vmatpush1.bf16.msra.mxu0 0
    %78 = vmatprep.subr.bf16.mxu0 0
    %79 = vmatpush1.bf16.msra.mxu0 0
    %80 = vmatprep.subr.bf16.mxu0 0
    %81 = vmatpush1.bf16.msra.mxu0 0
    %82 = vmatprep.subr.bf16.mxu0 0
    %83 = vmatpush1.bf16.msra.mxu0 0
    %84 = vmatprep.subr.bf16.mxu0 0
    %85 = vmatpush1.bf16.msra.mxu0 0
    %86 = vmatprep.subr.bf16.mxu0 0
    %87 = vmatpush1.bf16.msra.mxu0 0
    %88 = vmatprep.subr.bf16.mxu0 0
    %89 = vmatpush1.bf16.msra.mxu0 0
    %90 = vmatprep.subr.bf16.mxu0 0
    %91 = vmatpush1.bf16.msra.mxu0 0
    %92 = vmatprep.subr.bf16.mxu0 0
    %93 = vmatpush1.bf16.msra.mxu0 0
    %94 = vmatprep.subr.bf16.mxu0 0
    %95 = vmatpush1.bf16.msra.mxu0 0
    %96 = vmatprep.subr.bf16.mxu0 0
    %97 = vmatpush1.bf16.msra.mxu0 0
    %98 = vmatprep.mubr.bf16.mxu0 0
    %99 = vmatmul.mubr.bf16.gmra.mrb[0].mxu0 %v61
    %v100 = vpop.f32.mrb[0].mxu0
    %v101 = vadd.f32 %v35, %v100
    %v102 = vpop.f32.mrb[0].mxu0
    %v103 = vpop.f32.mrb[0].mxu0
    %v104 = vadd.f32 %v35, %v103
    %v105 = vpop.f32.mrb[0].mxu0
    %106 = vmatprep.mubr.bf16.mxu0 0
    %107 = vmatmul.mubr.bf16.gmra.mrb[0].mxu0 %v64
    %v108 = vpop.f32.mrb[0].mxu0
    %v109 = vadd.f32 %v35, %v108
    %v110 = vpop.f32.mrb[0].mxu0
    %v111 = vpop.f32.mrb[0].mxu0
    %v112 = vadd.f32 %v35, %v111
    %v113 = vpop.f32.mrb[0].mxu0
    %114 = vdwg.mxu0
    %v115 = vtanh.pop %v101
    %v116 = vtanh.pop %v104
    %v117 = vtanh.pop %v109
    %v118 = vtanh.pop %v112
    %v119 = vld [vmem:[%s3] sm:$0xff]
    %v120 = vld [vmem:[%s3 + $0x8] sm:$0xff]
    %v121 = vld [vmem:[%s3 + $0x10] sm:$0xff]
    %v122 = vld [vmem:[%s3 + $0x18] sm:$0xff]
    %v124 = vsel %vm59, %v115, 0
    %v127 = vsel %vm59, %v116, 0
    %v130 = vsel %vm59, %v117, 0
    %v133 = vsel %vm59, %v118, 0
    %135 = vmatprep.subr.mxu0 0.0
    %136 = vmatpush1.msra.mxu0 %v119
    %137 = vmatprep.subr.mxu0 0.0
    %138 = vmatpush1.msra.mxu0 %v120
    %139 = vmatprep.subr.mxu0 0.0
    %140 = vmatpush1.msra.mxu0 %v121
    %141 = vmatprep.subr.mxu0 0.0
    %142 = vmatpush1.msra.mxu0 %v122
    %143 = vmatprep.subr.mxu0 0.0
    %144 = vmatpush1.msra.mxu0 0.0
    %145 = vmatprep.subr.mxu0 0.0
    %146 = vmatpush1.msra.mxu0 0.0
    %147 = vmatprep.subr.mxu0 0.0
    %148 = vmatpush1.msra.mxu0 0.0
    %149 = vmatprep.subr.mxu0 0.0
    %150 = vmatpush1.msra.mxu0 0.0
    %151 = vmatprep.subr.mxu0 0.0
    %152 = vmatpush1.msra.mxu0 0.0
    %153 = vmatprep.subr.mxu0 0.0
    %154 = vmatpush1.msra.mxu0 0.0
    %155 = vmatprep.subr.mxu0 0.0
    %156 = vmatpush1.msra.mxu0 0.0
    %157 = vmatprep.subr.mxu0 0.0
    %158 = vmatpush1.msra.mxu0 0.0
    %159 = vmatprep.subr.mxu0 0.0
    %160 = vmatpush1.msra.mxu0 0.0
    %161 = vmatprep.subr.mxu0 0.0
    %162 = vmatpush1.msra.mxu0 0.0
    %163 = vmatprep.subr.mxu0 0.0
    %164 = vmatpush1.msra.mxu0 0.0
    %165 = vmatprep.subr.mxu0 0.0
    %166 = vmatpush1.msra.mxu0 0.0
    %167 = vmatprep.subr.mxu0 0.0
    %168 = vmatpush1.msra.mxu0 0.0
    %169 = vmatprep.subr.mxu0 0.0
    %170 = vmatpush1.msra.mxu0 0.0
    %171 = vmatprep.subr.mxu0 0.0
    %172 = vmatpush1.msra.mxu0 0.0
    %173 = vmatprep.subr.mxu0 0.0
    %174 = vmatpush1.msra.mxu0 0.0
    %175 = vmatprep.subr.mxu0 0.0
    %176 = vmatpush1.msra.mxu0 0.0
    %177 = vmatprep.subr.mxu0 0.0
    %178 = vmatpush1.msra.mxu0 0.0
    %179 = vmatprep.subr.mxu0 0.0
    %180 = vmatpush1.msra.mxu0 0.0
    %181 = vmatprep.subr.mxu0 0.0
    %182 = vmatpush1.msra.mxu0 0.0
    %183 = vmatprep.subr.mxu0 0.0
    %184 = vmatpush1.msra.mxu0 0.0
    %185 = vmatprep.subr.mxu0 0.0
    %186 = vmatpush1.msra.mxu0 0.0
    %187 = vmatprep.subr.mxu0 0.0
    %188 = vmatpush1.msra.mxu0 0.0
    %189 = vmatprep.subr.mxu0 0.0
    %190 = vmatpush1.msra.mxu0 0.0
    %191 = vmatprep.subr.mxu0 0.0
    %192 = vmatpush1.msra.mxu0 0.0
    %193 = vmatprep.subr.mxu0 0.0
    %194 = vmatpush1.msra.mxu0 0.0
    %195 = vmatprep.subr.mxu0 0.0
    %196 = vmatpush1.msra.mxu0 0.0
    %197 = vmatprep.subr.mxu0 0.0
    %198 = vmatpush1.msra.mxu0 0.0
    %199 = vmatprep.mubr.f32.mxu0 0.0
    %200 = vmatmul.mubr.f32.gmra.mrb[0].mxu0 %v124
    %v201 = vpop.f32.mrb[0].mxu0
    %v202 = vadd.f32 0.0, %v201
    %v203 = vpop.f32.mrb[0].mxu0
    %204 = vmatprep.mubr.f32.mxu0 0.0
    %205 = vmatmul.mubr.f32.gmra.mrb[0].mxu0 %v127
    %v206 = vpop.f32.mrb[0].mxu0
    %v207 = vadd.f32 0.0, %v206
    %v208 = vpop.f32.mrb[0].mxu0
    %209 = vmatprep.mubr.f32.mxu0 0.0
    %210 = vmatmul.mubr.f32.gmra.mrb[0].mxu0 %v130
    %v211 = vpop.f32.mrb[0].mxu0
    %v212 = vadd.f32 0.0, %v211
    %v213 = vpop.f32.mrb[0].mxu0
    %214 = vmatprep.mubr.f32.mxu0 0.0
    %215 = vmatmul.mubr.f32.gmra.mrb[0].mxu0 %v133
    %v216 = vpop.f32.mrb[0].mxu0
    %v217 = vadd.f32 0.0, %v216
    %v218 = vpop.f32.mrb[0].mxu0
    %219 = vdwg.mxu0
    %v220 = vlaneseq
    %v221 = vshrl.u32 %v220, 7
    %v222 = vadd.s32 %v221, 8
    %vm223 = vcmp.lt.s32.totalorder %v221, 8
    %vm224 = vcmp.lt.s32.totalorder %v222, 8
    %v225 = vsel %vm223, %v202, -3.4028235e+38
    %v226 = vsel %vm224, %v207, -3.4028235e+38
    %v227 = vsel %vm223, %v212, -3.4028235e+38
    %v228 = vsel %vm224, %v217, -3.4028235e+38
    %vm229 = vcmask 7168
    %v230 = vsel %vm229, %v225, -inf
    %v231 = vsel %vm229, %v226, -inf
    %v232 = vmax.f32 %v230, %v231
    %v233 = vrot.slane %v232, 4
    %v234 = vmax.f32 %v232, %v233
    %v235 = vrot.slane %v234, 2
    %v236 = vmax.f32 %v234, %v235
    %v237 = vrot.slane %v236, 1
    %v238 = vmax.f32 %v236, %v237
    %v239 = vsel %vm229, %v227, -inf
    %v240 = vsel %vm229, %v228, -inf
    %v241 = vmax.f32 %v239, %v240
    %v242 = vrot.slane %v241, 4
    %v243 = vmax.f32 %v241, %v242
    %v244 = vrot.slane %v243, 2
    %v245 = vmax.f32 %v243, %v244
    %v246 = vrot.slane %v245, 1
    %v247 = vmax.f32 %v245, %v246
    %v248 = vsub.f32 %v225, %v238
    %v249 = vsub.f32 %v226, %v238
    %v250 = vsub.f32 %v227, %v247
    %v251 = vsub.f32 %v228, %v247
    %v252 = vmul.f32 %v248, 1.442695
    %v253 = vpow.pop %v252
    %v254 = vmul.f32 %v249, 1.442695
    %v255 = vpow.pop %v254
    %v256 = vmul.f32 %v250, 1.442695
    %v257 = vpow.pop %v256
    %v258 = vmul.f32 %v251, 1.442695
    %v259 = vpow.pop %v258
    %v260 = vsel %vm229, %v253, 0.0
    %v261 = vsel %vm229, %v255, 0.0
    %v262 = vadd.f32 %v260, %v261
    %v263 = vrot.slane %v262, 4
    %v264 = vadd.f32 %v262, %v263
    %v265 = vrot.slane %v264, 2
    %v266 = vadd.f32 %v264, %v265
    %v267 = vrot.slane %v266, 1
    %v268 = vadd.f32 %v266, %v267
    %v269 = vsel %vm229, %v257, 0.0
    %v270 = vsel %vm229, %v259, 0.0
    %v271 = vadd.f32 %v269, %v270
    %v272 = vrot.slane %v271, 4
    %v273 = vadd.f32 %v271, %v272
    %v274 = vrot.slane %v273, 2
    %v275 = vadd.f32 %v273, %v274
    %v276 = vrot.slane %v275, 1
    %v277 = vadd.f32 %v275, %v276
    %v278 = vrcp.pop %v268
    %v279 = vmul.f32 %v253, %v278
    %v280 = vmul.f32 %v255, %v278
    %v281 = vrcp.pop %v277
    %v282 = vmul.f32 %v257, %v281
    %v283 = vmul.f32 %v259, %v281
    %v284 = vunpack.c.l.bf16 %v22
    %v285 = vunpack.c.l.bf16 %v23
    %v286 = vunpack.c.l.bf16 %v24
    %v287 = vunpack.c.l.bf16 %v25
    %289 = vset.pattern.permute.xlu0 0
    %290 = vperm.xlu0 %289, %v279
    %v291 = vpop.permute.xlu0 %290
    %294 = vset.pattern.permute.xlu0 0
    %295 = vperm.xlu0 %294, %v280
    %v296 = vpop.permute.xlu0 %295
    %299 = vset.pattern.permute.xlu0 0
    %300 = vperm.xlu0 %299, %v282
    %v301 = vpop.permute.xlu0 %300
    %304 = vset.pattern.permute.xlu0 0
    %305 = vperm.xlu0 %304, %v283
    %v306 = vpop.permute.xlu0 %305
    %v308 = vmul.f32 %v284, %v291
    %v309 = vmul.f32 %v285, %v296
    %v310 = vmul.f32 %v286, %v301
    %v311 = vmul.f32 %v287, %v306
    %v312 = vsel %vm59, %v308, 0.0
    %v313 = vsel %vm59, %v309, 0.0
    %v314 = vadd.f32 %v312, %v313
    %v315 = vrot.slane %v314, 4
    %v316 = vadd.f32 %v314, %v315
    %v317 = vrot.slane %v316, 2
    %v318 = vadd.f32 %v316, %v317
    %v319 = vrot.slane %v318, 1
    %v320 = vadd.f32 %v318, %v319
    %v321 = vsel %vm59, %v310, 0.0
    %v322 = vsel %vm59, %v311, 0.0
    %v323 = vadd.f32 %v321, %v322
    %v324 = vrot.slane %v323, 4
    %v325 = vadd.f32 %v323, %v324
    %v326 = vrot.slane %v325, 2
    %v327 = vadd.f32 %v325, %v326
    %v328 = vrot.slane %v327, 1
    %v329 = vadd.f32 %v327, %v328
    %vm332 = vcmask 1041409
    %v333 = vsel %vm332, %v329, %v320
    %vm335 = vcmask 254976
    %336 = vst.msk [vmem:[#allocation2] sm:$0x3] %vm335, %v333
    %v337 = vlaneseq
    %v338 = vand.u32 %v337, 127
    %v339 = vlaneseq
    %v340 = vshrl.u32 %v339, 7
    %v341 = vsub.s32 %v338, %v340
    %v342 = vrot.slane %v291, %v341
    %v343 = vadd.s32 %v338, 4294967288
    %v344 = vlaneseq
    %v345 = vshrl.u32 %v344, 7
    %v346 = vsub.s32 %v343, %v345
    %v347 = vrot.slane %v296, %v346
    %vm348 = vcmask 130112
    %v349 = vsel %vm348, %v347, %v342
    %v350 = vlaneseq
    %v351 = vshrl.u32 %v350, 7
    %v352 = vsub.s32 %v338, %v351
    %v353 = vrot.slane %v301, %v352
    %v354 = vlaneseq
    %v355 = vshrl.u32 %v354, 7
    %v356 = vsub.s32 %v343, %v355
    %v357 = vrot.slane %v306, %v356
    %v358 = vsel %vm348, %v357, %v353
    %v359 = vsel %vm332, %v358, %v349
    %vm361 = vcmask 123904
    %362 = vst.msk [vmem:[#allocation4] sm:$0x3] %vm361, %v359
    // Predicated region
    $region18: #{tpu_custom_call.1} parent=1 // pred_check
      _
    $region19: #{tpu_custom_call.1} parent=1 // pred_check_branch
      %364 = sbr.rel (0) target = $region21
    $region20: #{tpu_custom_call.1} parent=1 // pred_region
      %s366 = ssub.s32 32, 32
      %367 = vsyncadd [#allocation3], %s366
      %s369 = sshll.u32 [#allocation2], 4
      %s370 = int_to_ptr.vmem [resolvable:$true] %s369
      %372 = dma.vmem_to_hbm [thread:$0]  %s370, 32, %s4, [#allocation3]
    $region21: #{tpu_custom_call.1} parent=1 // pred_fallthru
      _
    // Predicated region
    $region22: #{tpu_custom_call.1} parent=1 // pred_check
      _
    $region23: #{tpu_custom_call.1} parent=1 // pred_check_branch
      %374 = sbr.rel (0) target = $region25
    $region24: #{tpu_custom_call.1} parent=1 // pred_region
      %s376 = ssub.s32 32, 32
      %377 = vsyncadd [#allocation5], %s376
      %s379 = sshll.u32 [#allocation4], 4
      %s380 = int_to_ptr.vmem [resolvable:$true] %s379
      %382 = dma.vmem_to_hbm [thread:$0]  %s380, 32, %s5, [#allocation5]
    $region25: #{tpu_custom_call.1} parent=1 // pred_fallthru
      _
    // Predicated region
    $region26: #{tpu_custom_call.1} parent=1 // pred_check
      _
    $region27: #{tpu_custom_call.1} parent=1 // pred_check_branch
      %384 = sbr.rel (0) target = $region29
    $region28: #{tpu_custom_call.1} parent=1 // pred_region
      %385 = dma.done [#allocation3], 32
    $region29: #{tpu_custom_call.1} parent=1 // pred_fallthru
      _
    // Predicated region
    $region30: #{tpu_custom_call.1} parent=1 // pred_check
      _
    $region31: #{tpu_custom_call.1} parent=1 // pred_check_branch
      %387 = sbr.rel (0) target = $region33
    $region32: #{tpu_custom_call.1} parent=1 // pred_region
      %388 = dma.done [#allocation5], 32
    $region33: #{tpu_custom_call.1} parent=1 // pred_fallthru
      _
    %389 = vsyncpa [#allocation3], 1
    %390 = vsyncpa [#allocation5], 1

</llo_original>
